<compile_context>
chip_gen: v5e
topology: v5e:2x2
jax: 0.10.0
libtpu: 0.0.40
codegen_flags: <defaults>
</compile_context>

<pallas_src>
import functools
import math

import jax
import jax.numpy as jnp
from jax.experimental import pallas as pl
from jax.experimental.pallas import tpu as pltpu


def _loss_kernel(pred_ref, tgt_ref, mask_ref, out_ref, *,
                 tile_r, tile_s, n_l1_cols, total_rows, total_cols):
    i = pl.program_id(0)
    j = pl.program_id(1)

    p = pred_ref[...].astype(jnp.float32)
    t = tgt_ref[...].astype(jnp.float32)
    m = mask_ref[...].astype(jnp.float32)

    d = p - t
    sq = d * d                                      # MSE branch
    ad = jnp.abs(d)
    l1 = jnp.where(ad < 1.0, 0.5 * sq, ad - 0.5)    # smooth_l1, beta = 1.0

    # Global row / col indices of this block (sublane iota / lane iota).
    row = i * tile_r + jax.lax.broadcasted_iota(jnp.int32, (tile_r, 1), 0)
    col = j * tile_s + jax.lax.broadcasted_iota(jnp.int32, (1, tile_s), 1)

    # First (C//2)*spatial columns of every row -> smooth_l1, rest -> mse.
    loss = jnp.where(col < n_l1_cols, l1, sq)
    # Kill cdiv-grid tail padding (stale / clipped reads).
    valid = (row < total_rows) & (col < total_cols)
    contrib = jnp.where(valid, loss * m, 0.0)

    # Reduce the whole block to one scalar partial (hidden under input DMAs).
    psum = jnp.sum(contrib, axis=1, keepdims=True)   # lane reduce (XLU)
    psum = jnp.sum(psum, axis=0, keepdims=True)      # (1, 1)

    # Store it at [0, 0] of this block's private (8, 128) output tile.
    r8 = jax.lax.broadcasted_iota(jnp.int32, (8, 128), 0)
    c128 = jax.lax.broadcasted_iota(jnp.int32, (8, 128), 1)
    out_ref[...] = jnp.where((r8 == 0) & (c128 == 0), psum, 0.0)


def masked_l1smooth_mse_loss(prediction, target, mask, *,
                             elem_budget=512 * 1024):
    """Scalar loss matching Masked_L1Smooth_MSELoss.forward."""
    assert prediction.shape == target.shape == mask.shape
    assert prediction.ndim >= 2 and prediction.shape[1] % 2 == 0
    bsz, chans = prediction.shape[0], prediction.shape[1]
    half = chans // 2
    spatial = int(math.prod(prediction.shape[2:]))

    rows = bsz                      # one row per batch element
    cols = chans * spatial          # lane-dense axis, first half*spatial cols = L1
    n_l1_cols = half * spatial
    numel = rows * cols

    # Free reshapes (row-major, no data movement / no extra HBM traffic).
    p2 = prediction.reshape(rows, cols)
    t2 = target.reshape(rows, cols)
    m2 = mask.reshape(rows, cols)

    itemsize = max(jnp.dtype(x.dtype).itemsize for x in (p2, t2, m2))

    # Column (lane) tile: full width if an 8-row slab fits the element budget,
    # otherwise the widest multiple of 128 that does.
    if cols <= 128 or cols * 8 <= elem_budget:
        tile_s = cols
    else:
        tile_s = max(128, min(cols, (elem_budget // 8) // 128 * 128))
    # Row (sublane) tile: fill the remaining budget, multiple of 8 (or all rows).
    tile_r = max(8, (elem_budget // tile_s) // 8 * 8)
    if tile_r >= rows:
        tile_r = rows

    grid_r = pl.cdiv(rows, tile_r)
    grid_s = pl.cdiv(cols, tile_s)

    # VMEM budget: 3 inputs x 2 pipeline buffers in native dtype, plus generous
    # headroom for block-sized f32 intermediates; well under v7x's 64 MiB.
    pad_r = max(8, ((tile_r + 7) // 8) * 8)
    pad_s = max(128, ((tile_s + 127) // 128) * 128)
    tile_elems = pad_r * pad_s
    vmem_limit = int(min(48 * 1024 * 1024,
                         6 * tile_elems * itemsize       # input double buffers
                         + 10 * tile_elems * 4           # f32 intermediates
                         + 2 * 1024 * 1024))             # slack

    kernel = functools.partial(
        _loss_kernel,
        tile_r=tile_r, tile_s=tile_s,
        n_l1_cols=n_l1_cols, total_rows=rows, total_cols=cols)

    in_spec = pl.BlockSpec((tile_r, tile_s), lambda i, j: (i, j))
    out_spec = pl.BlockSpec((8, 128), lambda i, j: (i, j))

    partials = pl.pallas_call(
        kernel,
        out_shape=jax.ShapeDtypeStruct((grid_r * 8, grid_s * 128), jnp.float32),
        grid_spec=pltpu.PrefetchScalarGridSpec(
            num_scalar_prefetch=0,
            grid=(grid_r, grid_s),
            in_specs=[in_spec, in_spec, in_spec],
            out_specs=out_spec,
        ),
        compiler_params=pltpu.CompilerParams(
            dimension_semantics=("parallel", "parallel"),
            vmem_limit_bytes=vmem_limit),
    )(p2, t2, m2)

    # Tiny final reduction + mean over all elements (matches torch loss.mean()).
    return jnp.sum(partials) * (1.0 / float(numel))


def _reference(prediction, target, mask):
    half = prediction.shape[1] // 2
    d = prediction - target
    ad = jnp.abs(d)
    l1 = jnp.where(ad < 1.0, 0.5 * d * d, ad - 0.5)
    sq = d * d
    loss = jnp.concatenate([l1[:, :half], sq[:, half:]], axis=1)
    return jnp.mean(loss * mask)


if __name__ == "__main__":
    key = jax.random.PRNGKey(0)
    k1, k2, k3 = jax.random.split(key, 3)

    # NCHW with C=6: channels chunk into first3 (smooth_l1) / last3 (mse).
    shape = (2, 6, 16, 16)
    prediction = jax.random.normal(k1, shape, dtype=jnp.float32) * 2.0
    target = jax.random.normal(k2, shape, dtype=jnp.float32) * 2.0
    mask = (jax.random.uniform(k3, shape) > 0.3).astype(jnp.float32)

    loss = masked_l1smooth_mse_loss(prediction, target, mask)
    loss = jax.block_until_ready(loss)

    ref = _reference(prediction, target, mask)
    assert jnp.allclose(loss, ref, rtol=1e-5, atol=1e-5), (loss, ref)
    print("KERNEL_OK")
</pallas_src>

<mosaic_0001>
module attributes {stable_mosaic.version = 11 : i64} {
  func.func @_loss_kernel(%arg0: i32, %arg1: i32, %arg2: memref<2x1536xf32, #tpu.memory_space<vmem>>, %arg3: memref<2x1536xf32, #tpu.memory_space<vmem>>, %arg4: memref<2x1536xf32, #tpu.memory_space<vmem>>, %arg5: memref<8x128xf32, #tpu.memory_space<vmem>>) attributes {dimension_semantics = [#tpu.dimension_semantics<parallel>, #tpu.dimension_semantics<parallel>], iteration_bounds = array<i64: 1, 1>, scalar_prefetch = 0 : i64, scratch_operands = 0 : i64, tpu.core_type = #tpu.core_type<tc>, window_params = [{transform_indices = @transform_0, window_bounds = array<i64: 2, 1536>}, {transform_indices = @transform_1, window_bounds = array<i64: 2, 1536>}, {transform_indices = @transform_2, window_bounds = array<i64: 2, 1536>}, {transform_indices = @transform_3, window_bounds = array<i64: 8, 128>}]} {
    %c0 = arith.constant 0 : index
    %c0_0 = arith.constant 0 : index
    %0 = vector.load %arg2[%c0, %c0_0] : memref<2x1536xf32, #tpu.memory_space<vmem>>, vector<2x1536xf32>
    %c0_1 = arith.constant 0 : index
    %c0_2 = arith.constant 0 : index
    %1 = vector.load %arg3[%c0_1, %c0_2] : memref<2x1536xf32, #tpu.memory_space<vmem>>, vector<2x1536xf32>
    %c0_3 = arith.constant 0 : index
    %c0_4 = arith.constant 0 : index
    %2 = vector.load %arg4[%c0_3, %c0_4] : memref<2x1536xf32, #tpu.memory_space<vmem>>, vector<2x1536xf32>
    %3 = arith.subf %0, %1 : vector<2x1536xf32>
    %4 = arith.mulf %3, %3 : vector<2x1536xf32>
    %5 = math.absf %3 : vector<2x1536xf32>
    %cst = arith.constant 1.000000e+00 : f32
    %6 = vector.broadcast %cst : f32 to vector<2x1536xf32>
    %7 = arith.cmpf olt, %5, %6 : vector<2x1536xf32>
    %cst_5 = arith.constant 5.000000e-01 : f32
    %8 = vector.broadcast %cst_5 : f32 to vector<2x1536xf32>
    %9 = arith.mulf %8, %4 : vector<2x1536xf32>
    %cst_6 = arith.constant 5.000000e-01 : f32
    %10 = vector.broadcast %cst_6 : f32 to vector<2x1536xf32>
    %11 = arith.subf %5, %10 : vector<2x1536xf32>
    %12 = arith.select %7, %9, %11 : vector<2x1536xi1>, vector<2x1536xf32>
    %c2_i32 = arith.constant 2 : i32
    %13 = arith.muli %arg0, %c2_i32 : i32
    %14 = tpu.iota {dimensions = array<i32: 0>} : vector<2x1xi32>
    %15 = vector.broadcast %13 : i32 to vector<2x1xi32>
    %16 = arith.addi %15, %14 : vector<2x1xi32>
    %c1536_i32 = arith.constant 1536 : i32
    %17 = arith.muli %arg1, %c1536_i32 : i32
    %18 = tpu.iota {dimensions = array<i32: 1>} : vector<1x1536xi32>
    %19 = vector.broadcast %17 : i32 to vector<1x1536xi32>
    %20 = arith.addi %19, %18 : vector<1x1536xi32>
    %c768_i32 = arith.constant 768 : i32
    %21 = vector.broadcast %c768_i32 : i32 to vector<1x1536xi32>
    %22 = arith.cmpi slt, %20, %21 : vector<1x1536xi32>
    %23 = vector.shape_cast %22 : vector<1x1536xi1> to vector<1x1536xi1>
    %24 = vector.broadcast %23 : vector<1x1536xi1> to vector<2x1536xi1>
    %25 = arith.select %24, %12, %4 : vector<2x1536xi1>, vector<2x1536xf32>
    %c2_i32_7 = arith.constant 2 : i32
    %26 = vector.broadcast %c2_i32_7 : i32 to vector<2x1xi32>
    %27 = arith.cmpi slt, %16, %26 : vector<2x1xi32>
    %c1536_i32_8 = arith.constant 1536 : i32
    %28 = vector.broadcast %c1536_i32_8 : i32 to vector<1x1536xi32>
    %29 = arith.cmpi slt, %20, %28 : vector<1x1536xi32>
    %30 = vector.broadcast %27 : vector<2x1xi1> to vector<2x1536xi1>
    %31 = vector.broadcast %29 : vector<1x1536xi1> to vector<2x1536xi1>
    %32 = arith.andi %30, %31 : vector<2x1536xi1>
    %33 = arith.mulf %25, %2 : vector<2x1536xf32>
    %cst_9 = arith.constant 0.000000e+00 : f32
    %34 = vector.broadcast %cst_9 : f32 to vector<2x1536xf32>
    %35 = arith.select %32, %33, %34 : vector<2x1536xi1>, vector<2x1536xf32>
    %cst_10 = arith.constant dense<0.000000e+00> : vector<2xf32>
    %36 = vector.multi_reduction <add>, %35, %cst_10 [1] : vector<2x1536xf32> to vector<2xf32>
    %37 = vector.shape_cast %36 : vector<2xf32> to vector<2x1xf32>
    %cst_11 = arith.constant dense<0.000000e+00> : vector<1xf32>
    %38 = vector.multi_reduction <add>, %37, %cst_11 [0] : vector<2x1xf32> to vector<1xf32>
    %39 = vector.shape_cast %38 : vector<1xf32> to vector<1x1xf32>
    %40 = tpu.iota {dimensions = array<i32: 0>} : vector<8x128xi32>
    %41 = tpu.iota {dimensions = array<i32: 1>} : vector<8x128xi32>
    %c0_i32 = arith.constant 0 : i32
    %42 = vector.broadcast %c0_i32 : i32 to vector<8x128xi32>
    %43 = arith.cmpi eq, %40, %42 : vector<8x128xi32>
    %c0_i32_12 = arith.constant 0 : i32
    %44 = vector.broadcast %c0_i32_12 : i32 to vector<8x128xi32>
    %45 = arith.cmpi eq, %41, %44 : vector<8x128xi32>
    %46 = arith.andi %43, %45 : vector<8x128xi1>
    %cst_13 = arith.constant 0.000000e+00 : f32
    %47 = vector.shape_cast %39 : vector<1x1xf32> to vector<1x1xf32>
    %48 = vector.broadcast %47 : vector<1x1xf32> to vector<8x128xf32>
    %49 = vector.broadcast %cst_13 : f32 to vector<8x128xf32>
    %50 = arith.select %46, %48, %49 : vector<8x128xi1>, vector<8x128xf32>
    %c0_14 = arith.constant 0 : index
    %c0_15 = arith.constant 0 : index
    %51 = vector.load %arg5[%c0_14, %c0_15] : memref<8x128xf32, #tpu.memory_space<vmem>>, vector<8x128xf32>
    tpu.vector_store %arg5[%c0_14, %c0_15], %50 {strides = array<i32>} : memref<8x128xf32, #tpu.memory_space<vmem>>, vector<8x128xf32>,
    return
  }
  func.func @transform_0(%arg0: i32, %arg1: i32) -> (i32, i32) {
    %c0_i32 = arith.constant 0 : i32
    return %arg0, %arg1 : i32, i32
  }
  func.func @transform_1(%arg0: i32, %arg1: i32) -> (i32, i32) {
    %c0_i32 = arith.constant 0 : i32
    return %arg0, %arg1 : i32, i32
  }
  func.func @transform_2(%arg0: i32, %arg1: i32) -> (i32, i32) {
    %c0_i32 = arith.constant 0 : i32
    return %arg0, %arg1 : i32, i32
  }
  func.func @transform_3(%arg0: i32, %arg1: i32) -> (i32, i32) {
    %c0_i32 = arith.constant 0 : i32
    return %arg0, %arg1 : i32, i32
  }
}

</mosaic_0001>

<llo_original>
// kernel: tpu_custom_call.1
$region0: #{tpu_custom_call.1}
  #allocation0 [shape = 'u32[]', space=smem, size = 0x4, offset = 0x4, fixed_abs, tag = 'smem constant byte address 0x4 - core index']
  #allocation1 [shape = 'u32[72,128]{1,0:T(1,128)}', space=vmem, size = 0x9000, scoped, tag = 'internal scratch']
  %s0 = inlined_call_operand.hbm [shape: f32[2,1536], index: 0, kind: input, shape index: {}]
  %s1 = inlined_call_operand.hbm [shape: f32[2,1536], index: 1, kind: input, shape index: {}]
  %s2 = inlined_call_operand.hbm [shape: f32[2,1536], index: 2, kind: input, shape index: {}]
  %s3 = inlined_call_operand.hbm [shape: f32[8,128], index: 3, kind: output, shape index: {}]
  %s4 = sld [smem:[#allocation0]]
  $region34: #{tpu_custom_call.1} parent=0
    _
  %s6 = ssub.s32 1, %s4
  %s7 = scalar_select 0, %s6, %s4
  $region1: #{tpu_custom_call.1} parent=0
    #allocation2 [shape = 'u8[12288]{0}', space=vmem, size = 0x3000, scoped, tag = 'input window, operand 0, single buffered']
    #allocation3 [shape = 's32[1]{0}', space=sflag, size = 0x4, scoped, tag = 'scoped memory for tpu_custom_call.1']
    #allocation4 [shape = 's32[1]{0}', space=sflag, size = 0x4, scoped, tag = 'scoped memory for tpu_custom_call.1']
    #allocation5 [shape = 'u8[12288]{0}', space=vmem, size = 0x3000, scoped, tag = 'input window, operand 1, single buffered']
    #allocation6 [shape = 's32[1]{0}', space=sflag, size = 0x4, scoped, tag = 'scoped memory for tpu_custom_call.1']
    #allocation7 [shape = 'u8[12288]{0}', space=vmem, size = 0x3000, scoped, tag = 'input window, operand 2, single buffered']
    #allocation8 [shape = 'u8[4096]{0}', space=vmem, size = 0x1000, scoped, tag = 'output window, operand 0, single buffered']
    %8 = vsyncpa [#allocation3], 0
    %9 = vsyncpa [#allocation6], 0
    %10 = vsyncpa [#allocation4], 0
    // Predicated region
    $region2: #{tpu_custom_call.1} parent=1 // pred_check
      _
    $region3: #{tpu_custom_call.1} parent=1 // pred_check_branch
      %12 = sbr.rel (0) target = $region5
    $region4: #{tpu_custom_call.1} parent=1 // pred_region
      %14 = vsyncadd [#allocation3], 0
      %s16 = sshll.u32 %s0, 4
      %s17 = int_to_ptr.hbm [resolvable:$true] %s16
      %s18 = sshll.u32 [#allocation2], 4
      %s19 = int_to_ptr.vmem [resolvable:$true] %s18
      %21 = dma.hbm_to_vmem [thread:$0]  %s17, 384, %s19, [#allocation3]
    $region5: #{tpu_custom_call.1} parent=1 // pred_fallthru
      _
    // Predicated region
    $region6: #{tpu_custom_call.1} parent=1 // pred_check
      _
    $region7: #{tpu_custom_call.1} parent=1 // pred_check_branch
      %23 = sbr.rel (0) target = $region9
    $region8: #{tpu_custom_call.1} parent=1 // pred_region
      %25 = vsyncadd [#allocation6], 0
      %s27 = sshll.u32 %s1, 4
      %s28 = int_to_ptr.hbm [resolvable:$true] %s27
      %s29 = sshll.u32 [#allocation5], 4
      %s30 = int_to_ptr.vmem [resolvable:$true] %s29
      %32 = dma.hbm_to_vmem [thread:$0]  %s28, 384, %s30, [#allocation6]
    $region9: #{tpu_custom_call.1} parent=1 // pred_fallthru
      _
    // Predicated region
    $region10: #{tpu_custom_call.1} parent=1 // pred_check
      _
    $region11: #{tpu_custom_call.1} parent=1 // pred_check_branch
      %34 = sbr.rel (0) target = $region13
    $region12: #{tpu_custom_call.1} parent=1 // pred_region
      %36 = vsyncadd [#allocation6], 0
      %s38 = sshll.u32 %s2, 4
      %s39 = int_to_ptr.hbm [resolvable:$true] %s38
      %s40 = sshll.u32 [#allocation7], 4
      %s41 = int_to_ptr.vmem [resolvable:$true] %s40
      %43 = dma.hbm_to_vmem [thread:$0]  %s39, 384, %s41, [#allocation6]
    $region13: #{tpu_custom_call.1} parent=1 // pred_fallthru
      _
    // Predicated region
    $region14: #{tpu_custom_call.1} parent=1 // pred_check
      _
    $region15: #{tpu_custom_call.1} parent=1 // pred_check_branch
      %45 = sbr.rel (0) target = $region17
    $region16: #{tpu_custom_call.1} parent=1 // pred_region
      %47 = dma.done [#allocation3], 384
    $region17: #{tpu_custom_call.1} parent=1 // pred_fallthru
      _
    // Predicated region
    $region18: #{tpu_custom_call.1} parent=1 // pred_check
      _
    $region19: #{tpu_custom_call.1} parent=1 // pred_check_branch
      %49 = sbr.rel (0) target = $region21
    $region20: #{tpu_custom_call.1} parent=1 // pred_region
      %51 = dma.done [#allocation6], 384
    $region21: #{tpu_custom_call.1} parent=1 // pred_fallthru
      _
    // Predicated region
    $region22: #{tpu_custom_call.1} parent=1 // pred_check
      _
    $region23: #{tpu_custom_call.1} parent=1 // pred_check_branch
      %53 = sbr.rel (0) target = $region25
    $region24: #{tpu_custom_call.1} parent=1 // pred_region
      %55 = dma.done [#allocation6], 384
    $region25: #{tpu_custom_call.1} parent=1 // pred_fallthru
      _
    %v56 = vld [vmem:[#allocation2] sm:$0xff]
    %v57 = vld [vmem:[#allocation2 + $0x8] sm:$0xff]
    %v58 = vld [vmem:[#allocation2 + $0x10] sm:$0xff]
    %v59 = vld [vmem:[#allocation5] sm:$0xff]
    %v60 = vld [vmem:[#allocation5 + $0x8] sm:$0xff]
    %v61 = vld [vmem:[#allocation5 + $0x10] sm:$0xff]
    %v62 = vld [vmem:[#allocation7] sm:$0xff]
    %v63 = vld [vmem:[#allocation7 + $0x8] sm:$0xff]
    %v64 = vld [vmem:[#allocation7 + $0x10] sm:$0xff]
    %v65 = vsub.f32 %v56, %v59
    %v66 = vsub.f32 %v57, %v60
    %v67 = vsub.f32 %v58, %v61
    %v68 = vmul.f32 %v65, %v65
    %v69 = vmul.f32 %v66, %v66
    %v70 = vmul.f32 %v67, %v67
    %v71 = vand.u32 2147483647, %v65
    %v72 = vand.u32 2147483647, %v66
    %v73 = vand.u32 2147483647, %v67
    %vm74 = vcmp.lt.f32.partialorder %v71, 1.0
    %vm75 = vcmp.lt.f32.partialorder %v72, 1.0
    %vm76 = vcmp.lt.f32.partialorder %v73, 1.0
    %v77 = vmul.f32 %v68, 0.5
    %v78 = vmul.f32 %v69, 0.5
    %v79 = vmul.f32 %v70, 0.5
    %v80 = vsub.f32 %v71, 0.5
    %v81 = vsub.f32 %v72, 0.5
    %v82 = vsub.f32 %v73, 0.5
    %v83 = vsel %vm74, %v77, %v80
    %v84 = vsel %vm75, %v78, %v81
    %v85 = vsel %vm76, %v79, %v82
    %s86 = smul.u32 0, 2
    %v87 = vlaneseq
    %v88 = vshrl.u32 %v87, 7
    %v89 = vstv %s86
    %v90 = vadd.s32 %v89, %v88
    %s91 = smul.u32 0, 1536
    %v92 = vlaneseq
    %v93 = vand.u32 %v92, 127
    %v94 = vadd.s32 %v93, 128
    %v95 = vadd.s32 %v93, 256
    %v96 = vadd.s32 %v93, 384
    %v97 = vadd.s32 %v93, 512
    %v98 = vadd.s32 %v93, 640
    %v99 = vadd.s32 %v93, 768
    %v100 = vadd.s32 %v93, 896
    %v101 = vadd.s32 %v93, 1024
    %v102 = vadd.s32 %v93, 1152
    %v103 = vadd.s32 %v93, 1280
    %v104 = vadd.s32 %v93, 1408
    %v105 = vstv %s91
    %v106 = vadd.s32 %v105, %v93
    %v107 = vadd.s32 %v105, %v94
    %v108 = vadd.s32 %v105, %v95
    %v109 = vadd.s32 %v105, %v96
    %v110 = vadd.s32 %v105, %v97
    %v111 = vadd.s32 %v105, %v98
    %v112 = vadd.s32 %v105, %v99
    %v113 = vadd.s32 %v105, %v100
    %v114 = vadd.s32 %v105, %v101
    %v115 = vadd.s32 %v105, %v102
    %v116 = vadd.s32 %v105, %v103
    %v117 = vadd.s32 %v105, %v104
    %vm118 = vcmp.lt.s32.totalorder %v106, 768
    %vm119 = vcmp.lt.s32.totalorder %v107, 768
    %vm120 = vcmp.lt.s32.totalorder %v108, 768
    %vm121 = vcmp.lt.s32.totalorder %v109, 768
    %vm122 = vcmp.lt.s32.totalorder %v110, 768
    %vm123 = vcmp.lt.s32.totalorder %v111, 768
    %vm124 = vcmp.lt.s32.totalorder %v112, 768
    %vm125 = vcmp.lt.s32.totalorder %v113, 768
    %vm126 = vcmp.lt.s32.totalorder %v114, 768
    %vm127 = vcmp.lt.s32.totalorder %v115, 768
    %vm128 = vcmp.lt.s32.totalorder %v116, 768
    %vm129 = vcmp.lt.s32.totalorder %v117, 768
    %v130 = vsel %vm118, 1, 0
    %v131 = vsel %vm119, 1, 0
    %v132 = vsel %vm120, 1, 0
    %v133 = vsel %vm121, 1, 0
    %v134 = vsel %vm122, 1, 0
    %v135 = vsel %vm123, 1, 0
    %v136 = vsel %vm124, 1, 0
    %v137 = vsel %vm125, 1, 0
    %v138 = vsel %vm126, 1, 0
    %v139 = vsel %vm127, 1, 0
    %v140 = vsel %vm128, 1, 0
    %v141 = vsel %vm129, 1, 0
    %vm142 = vcmp.eq.s32.totalorder %v130, 1
    %vm143 = vcmp.eq.s32.totalorder %v131, 1
    %vm144 = vcmp.eq.s32.totalorder %v132, 1
    %vm145 = vcmp.eq.s32.totalorder %v133, 1
    %vm146 = vcmp.eq.s32.totalorder %v134, 1
    %vm147 = vcmp.eq.s32.totalorder %v135, 1
    %vm148 = vcmp.eq.s32.totalorder %v136, 1
    %vm149 = vcmp.eq.s32.totalorder %v137, 1
    %vm150 = vcmp.eq.s32.totalorder %v138, 1
    %vm151 = vcmp.eq.s32.totalorder %v139, 1
    %vm152 = vcmp.eq.s32.totalorder %v140, 1
    %vm153 = vcmp.eq.s32.totalorder %v141, 1
    %157 = vst [vmem:[#allocation1] ss:$4 sm:$0xff] %v83
    %s158 = scalar_lea.vmem [#allocation1], 32
    %159 = vst [vmem:[%s158] ss:$4 sm:$0xff] %v84
    %v160 = vld.sshfl [vmem:[#allocation1] sm:$0xff pattern:$0x73625140]
    %v161 = vld.sshfl [vmem:[#allocation1 + $0x8] sm:$0xff pattern:$0x73625140]
    %v162 = vld.sshfl [vmem:[#allocation1 + $0x10] sm:$0xff pattern:$0x73625140]
    %v163 = vld.sshfl [vmem:[#allocation1 + $0x18] sm:$0xff pattern:$0x73625140]
    %v164 = vld.sshfl [vmem:[#allocation1 + $0x20] sm:$0xff pattern:$0x73625140]
    %v165 = vld.sshfl [vmem:[#allocation1 + $0x28] sm:$0xff pattern:$0x73625140]
    %v166 = vld.sshfl [vmem:[#allocation1 + $0x30] sm:$0xff pattern:$0x73625140]
    %v167 = vld.sshfl [vmem:[#allocation1 + $0x38] sm:$0xff pattern:$0x73625140]
    %168 = vst [vmem:[#allocation1] ss:$4 sm:$0xff] %v85
    %v169 = vld.sshfl [vmem:[#allocation1] sm:$0xff pattern:$0x73625140]
    %v170 = vld.sshfl [vmem:[#allocation1 + $0x8] sm:$0xff pattern:$0x73625140]
    %v171 = vld.sshfl [vmem:[#allocation1 + $0x10] sm:$0xff pattern:$0x73625140]
    %v172 = vld.sshfl [vmem:[#allocation1 + $0x18] sm:$0xff pattern:$0x73625140]
    %188 = vst [vmem:[#allocation1] ss:$4 sm:$0xff] %v68
    %s189 = scalar_lea.vmem [#allocation1], 32
    %190 = vst [vmem:[%s189] ss:$4 sm:$0xff] %v69
    %v191 = vld.sshfl [vmem:[#allocation1] sm:$0xff pattern:$0x73625140]
    %v192 = vld.sshfl [vmem:[#allocation1 + $0x8] sm:$0xff pattern:$0x73625140]
    %v193 = vld.sshfl [vmem:[#allocation1 + $0x10] sm:$0xff pattern:$0x73625140]
    %v194 = vld.sshfl [vmem:[#allocation1 + $0x18] sm:$0xff pattern:$0x73625140]
    %v195 = vld.sshfl [vmem:[#allocation1 + $0x20] sm:$0xff pattern:$0x73625140]
    %v196 = vld.sshfl [vmem:[#allocation1 + $0x28] sm:$0xff pattern:$0x73625140]
    %v197 = vld.sshfl [vmem:[#allocation1 + $0x30] sm:$0xff pattern:$0x73625140]
    %v198 = vld.sshfl [vmem:[#allocation1 + $0x38] sm:$0xff pattern:$0x73625140]
    %199 = vst [vmem:[#allocation1] ss:$4 sm:$0xff] %v70
    %v200 = vld.sshfl [vmem:[#allocation1] sm:$0xff pattern:$0x73625140]
    %v201 = vld.sshfl [vmem:[#allocation1 + $0x8] sm:$0xff pattern:$0x73625140]
    %v202 = vld.sshfl [vmem:[#allocation1 + $0x10] sm:$0xff pattern:$0x73625140]
    %v203 = vld.sshfl [vmem:[#allocation1 + $0x18] sm:$0xff pattern:$0x73625140]
    %v216 = vsel %vm142, %v160, %v191
    %v217 = vsel %vm143, %v161, %v192
    %v218 = vsel %vm144, %v162, %v193
    %v219 = vsel %vm145, %v163, %v194
    %v220 = vsel %vm146, %v164, %v195
    %v221 = vsel %vm147, %v165, %v196
    %v222 = vsel %vm148, %v166, %v197
    %v223 = vsel %vm149, %v167, %v198
    %v224 = vsel %vm150, %v169, %v200
    %v225 = vsel %vm151, %v170, %v201
    %v226 = vsel %vm152, %v171, %v202
    %v227 = vsel %vm153, %v172, %v203
    %vm228 = vcmp.lt.s32.totalorder %v90, 2
    %vm229 = vcmp.lt.s32.totalorder %v106, 1536
    %vm230 = vcmp.lt.s32.totalorder %v107, 1536
    %vm231 = vcmp.lt.s32.totalorder %v108, 1536
    %vm232 = vcmp.lt.s32.totalorder %v109, 1536
    %vm233 = vcmp.lt.s32.totalorder %v110, 1536
    %vm234 = vcmp.lt.s32.totalorder %v111, 1536
    %vm235 = vcmp.lt.s32.totalorder %v112, 1536
    %vm236 = vcmp.lt.s32.totalorder %v113, 1536
    %vm237 = vcmp.lt.s32.totalorder %v114, 1536
    %vm238 = vcmp.lt.s32.totalorder %v115, 1536
    %vm239 = vcmp.lt.s32.totalorder %v116, 1536
    %vm240 = vcmp.lt.s32.totalorder %v117, 1536
    %v241 = vsel %vm228, 1, 0
    %vm242 = vcmp.eq.s32.totalorder %v241, 1
    %v243 = vsel %vm229, 1, 0
    %v244 = vsel %vm230, 1, 0
    %v245 = vsel %vm231, 1, 0
    %v246 = vsel %vm232, 1, 0
    %v247 = vsel %vm233, 1, 0
    %v248 = vsel %vm234, 1, 0
    %v249 = vsel %vm235, 1, 0
    %v250 = vsel %vm236, 1, 0
    %v251 = vsel %vm237, 1, 0
    %v252 = vsel %vm238, 1, 0
    %v253 = vsel %vm239, 1, 0
    %v254 = vsel %vm240, 1, 0
    %vm255 = vcmp.eq.s32.totalorder %v243, 1
    %vm256 = vcmp.eq.s32.totalorder %v244, 1
    %vm257 = vcmp.eq.s32.totalorder %v245, 1
    %vm258 = vcmp.eq.s32.totalorder %v246, 1
    %vm259 = vcmp.eq.s32.totalorder %v247, 1
    %vm260 = vcmp.eq.s32.totalorder %v248, 1
    %vm261 = vcmp.eq.s32.totalorder %v249, 1
    %vm262 = vcmp.eq.s32.totalorder %v250, 1
    %vm263 = vcmp.eq.s32.totalorder %v251, 1
    %vm264 = vcmp.eq.s32.totalorder %v252, 1
    %vm265 = vcmp.eq.s32.totalorder %v253, 1
    %vm266 = vcmp.eq.s32.totalorder %v254, 1
    %vm267 = vmand %vm242, %vm255
    %vm268 = vmand %vm242, %vm256
    %vm269 = vmand %vm242, %vm257
    %vm270 = vmand %vm242, %vm258
    %vm271 = vmand %vm242, %vm259
    %vm272 = vmand %vm242, %vm260
    %vm273 = vmand %vm242, %vm261
    %vm274 = vmand %vm242, %vm262
    %vm275 = vmand %vm242, %vm263
    %vm276 = vmand %vm242, %vm264
    %vm277 = vmand %vm242, %vm265
    %vm278 = vmand %vm242, %vm266
    %282 = vst [vmem:[#allocation1] ss:$4 sm:$0xff] %v62
    %s283 = scalar_lea.vmem [#allocation1], 32
    %284 = vst [vmem:[%s283] ss:$4 sm:$0xff] %v63
    %v285 = vld.sshfl [vmem:[#allocation1] sm:$0xff pattern:$0x73625140]
    %v286 = vld.sshfl [vmem:[#allocation1 + $0x8] sm:$0xff pattern:$0x73625140]
    %v287 = vld.sshfl [vmem:[#allocation1 + $0x10] sm:$0xff pattern:$0x73625140]
    %v288 = vld.sshfl [vmem:[#allocation1 + $0x18] sm:$0xff pattern:$0x73625140]
    %v289 = vld.sshfl [vmem:[#allocation1 + $0x20] sm:$0xff pattern:$0x73625140]
    %v290 = vld.sshfl [vmem:[#allocation1 + $0x28] sm:$0xff pattern:$0x73625140]
    %v291 = vld.sshfl [vmem:[#allocation1 + $0x30] sm:$0xff pattern:$0x73625140]
    %v292 = vld.sshfl [vmem:[#allocation1 + $0x38] sm:$0xff pattern:$0x73625140]
    %293 = vst [vmem:[#allocation1] ss:$4 sm:$0xff] %v64
    %v294 = vld.sshfl [vmem:[#allocation1] sm:$0xff pattern:$0x73625140]
    %v295 = vld.sshfl [vmem:[#allocation1 + $0x8] sm:$0xff pattern:$0x73625140]
    %v296 = vld.sshfl [vmem:[#allocation1 + $0x10] sm:$0xff pattern:$0x73625140]
    %v297 = vld.sshfl [vmem:[#allocation1 + $0x18] sm:$0xff pattern:$0x73625140]
    %v310 = vmul.f32 %v216, %v285
    %v311 = vmul.f32 %v217, %v286
    %v312 = vmul.f32 %v218, %v287
    %v313 = vmul.f32 %v219, %v288
    %v314 = vmul.f32 %v220, %v289
    %v315 = vmul.f32 %v221, %v290
    %v316 = vmul.f32 %v222, %v291
    %v317 = vmul.f32 %v223, %v292
    %v318 = vmul.f32 %v224, %v294
    %v319 = vmul.f32 %v225, %v295
    %v320 = vmul.f32 %v226, %v296
    %v321 = vmul.f32 %v227, %v297
    %v322 = vsel %vm267, %v310, 0.0
    %v323 = vsel %vm268, %v311, 0.0
    %v324 = vsel %vm269, %v312, 0.0
    %v325 = vsel %vm270, %v313, 0.0
    %v326 = vsel %vm271, %v314, 0.0
    %v327 = vsel %vm272, %v315, 0.0
    %v328 = vsel %vm273, %v316, 0.0
    %v329 = vsel %vm274, %v317, 0.0
    %v330 = vsel %vm275, %v318, 0.0
    %v331 = vsel %vm276, %v319, 0.0
    %v332 = vsel %vm277, %v320, 0.0
    %v333 = vsel %vm278, %v321, 0.0
    %vm334 = vcmask 1041408
    %v335 = vsel %vm334, %v322, 0.0
    %v336 = vsel %vm334, %v323, 0.0
    %v337 = vadd.f32 %v335, %v336
    %v338 = vsel %vm334, %v324, 0.0
    %v339 = vadd.f32 %v337, %v338
    %v340 = vsel %vm334, %v325, 0.0
    %v341 = vadd.f32 %v339, %v340
    %v342 = vsel %vm334, %v326, 0.0
    %v343 = vadd.f32 %v341, %v342
    %v344 = vsel %vm334, %v327, 0.0
    %v345 = vadd.f32 %v343, %v344
    %v346 = vsel %vm334, %v328, 0.0
    %v347 = vadd.f32 %v345, %v346
    %v348 = vsel %vm334, %v329, 0.0
    %v349 = vadd.f32 %v347, %v348
    %v350 = vsel %vm334, %v330, 0.0
    %v351 = vadd.f32 %v349, %v350
    %v352 = vsel %vm334, %v331, 0.0
    %v353 = vadd.f32 %v351, %v352
    %v354 = vsel %vm334, %v332, 0.0
    %v355 = vadd.f32 %v353, %v354
    %v356 = vsel %vm334, %v333, 0.0
    %v357 = vadd.f32 %v355, %v356
    %358 = vadd.xlane.f32.xlu0 %v357
    %v359 = vpop.xlane.xlu0 %358
    %v360 = vsel %vm334, %v359, 0.0
    %v361 = vrot.slane %v360, 4
    %v362 = vadd.f32 %v360, %v361
    %v363 = vrot.slane %v362, 2
    %v364 = vadd.f32 %v362, %v363
    %v365 = vrot.slane %v364, 1
    %v366 = vadd.f32 %v364, %v365
    %vm367 = vcmp.eq.s32.totalorder %v88, 0
    %vm368 = vcmp.eq.s32.totalorder %v93, 0
    %vm369 = vmand %vm367, %vm368
    %v370 = vsel %vm369, %v366, 0.0
    %371 = vst [vmem:[#allocation8] sm:$0xff] %v370
    // Predicated region
    $region26: #{tpu_custom_call.1} parent=1 // pred_check
      _
    $region27: #{tpu_custom_call.1} parent=1 // pred_check_branch
      %373 = sbr.rel (0) target = $region29
    $region28: #{tpu_custom_call.1} parent=1 // pred_region
      %375 = vsyncadd [#allocation4], 0
      %s377 = sshll.u32 [#allocation8], 4
      %s378 = int_to_ptr.vmem [resolvable:$true] %s377
      %s379 = sshll.u32 %s3, 4
      %s380 = int_to_ptr.hbm [resolvable:$true] %s379
      %382 = dma.vmem_to_hbm [thread:$0]  %s378, 128, %s380, [#allocation4]
    $region29: #{tpu_custom_call.1} parent=1 // pred_fallthru
      _
    // Predicated region
    $region30: #{tpu_custom_call.1} parent=1 // pred_check
      _
    $region31: #{tpu_custom_call.1} parent=1 // pred_check_branch
      %384 = sbr.rel (0) target = $region33
    $region32: #{tpu_custom_call.1} parent=1 // pred_region
      %386 = dma.done [#allocation4], 128
    $region33: #{tpu_custom_call.1} parent=1 // pred_fallthru
      _
    %387 = vsyncpa [#allocation3], 1
    %388 = vsyncpa [#allocation6], 1
    %389 = vsyncpa [#allocation4], 1

</llo_original>
